<compile_context>
chip_gen: v7x
topology: tpu7x:2x2x1
jax: 0.10.0
libtpu: 0.0.40
codegen_flags: <defaults>
</compile_context>

<pallas_src>
import jax
import jax.numpy as jnp
from jax.experimental import pallas as pl
from jax.experimental.pallas import tpu as pltpu

LANE = 128            # pad head output columns to a multiple of this (lane-dense stores)
SUBLANE = 8           # f32 sublane granule for batch tiles
GRIDLESS_MAX_B = 512  # below this a single resident VMEM block beats a pipelined grid


def _round_up(n, m):
    return ((n + m - 1) // m) * m


def generator_kernel(x_ref, w1_ref, b1_ref, w2_ref, b2_ref, wh_ref, bh_ref, o_ref):
    """MultiDenseLayers (Linear->Tanh->Linear->Tanh) + fused [edges|nodes] head.

    The head weights already carry the edge symmetrization + (0,2,3,1) permute, so
    the single lane-dense (multiple-of-128) output tile is the final logits layout.
    """
    h = jnp.tanh(
        jnp.dot(x_ref[...], w1_ref[...], preferred_element_type=jnp.float32)
        + b1_ref[...]
    )
    h = jnp.tanh(
        jnp.dot(h, w2_ref[...], preferred_element_type=jnp.float32)
        + b2_ref[...]
    )
    y = jnp.dot(h, wh_ref[...], preferred_element_type=jnp.float32) + bh_ref[...]
    o_ref[...] = y.astype(o_ref.dtype)


def prepare_generator_params(params, *, edges, vertexes, nodes):
    """One-time (hoisted) head fusion.

    Folds the (e + e^T)/2 symmetrization and the (0,2,3,1) permute of the edge
    logits into the edge-head columns, zero-pads both heads to 128-lane multiples,
    and concatenates them into a single lane-dense weight/bias so the kernel does
    ONE unmasked-store matmul for both heads.
    """
    E, V, N = edges, vertexes, nodes
    edges_dim = E * V * V
    nodes_dim = V * N
    edges_pad = _round_up(edges_dim, LANE)
    nodes_pad = _round_up(nodes_dim, LANE)

    def fold_edges(m):  # m: (rows, E*V*V), rows = d2 for weights, 1 for bias
        rows = m.shape[0]
        m = m.reshape(rows, E, V, V)
        m = (m + jnp.swapaxes(m, -1, -2)) * 0.5        # symmetrize over (i, j)
        m = jnp.transpose(m, (0, 2, 3, 1))             # (rows, V, V, E) final layout
        return m.reshape(rows, edges_dim)

    we = jnp.pad(fold_edges(params["we"]), ((0, 0), (0, edges_pad - edges_dim)))
    be = jnp.pad(fold_edges(params["be"]), ((0, 0), (0, edges_pad - edges_dim)))
    wn = jnp.pad(params["wn"], ((0, 0), (0, nodes_pad - nodes_dim)))
    bn = jnp.pad(params["bn"], ((0, 0), (0, nodes_pad - nodes_dim)))

    return {
        "w1": params["w1"], "b1": params["b1"],
        "w2": params["w2"], "b2": params["b2"],
        "wh": jnp.concatenate([we, wn], axis=1),   # (d2, edges_pad + nodes_pad)
        "bh": jnp.concatenate([be, bn], axis=1),   # (1,  edges_pad + nodes_pad)
    }


def classical_generator_forward(x, fused, *, edges, vertexes, nodes,
                                batch_tile=2048, out_dtype=jnp.float32):
    B, z_dim = x.shape
    w1, b1 = fused["w1"], fused["b1"]
    w2, b2 = fused["w2"], fused["b2"]
    wh, bh = fused["wh"], fused["bh"]
    d1, d2 = w1.shape[1], w2.shape[1]
    out_width = wh.shape[1]

    E, V, N = edges, vertexes, nodes
    edges_dim = E * V * V
    nodes_dim = V * N
    edges_pad = _round_up(edges_dim, LANE)

    inputs = (x, w1, b1, w2, b2, wh, bh)

    weight_bytes = 4 * (z_dim * d1 + d1 + d1 * d2 + d2 + d2 * out_width + out_width)
    cost = pl.CostEstimate(
        flops=int(2 * B * (z_dim * d1 + d1 * d2 + d2 * out_width)),
        transcendentals=int(B * (d1 + d2)),
        bytes_accessed=int(4 * B * (z_dim + out_width) + weight_bytes),
    )

    if B > GRIDLESS_MAX_B:
        # Batch-tiled path: weights resident across the grid (constant block index,
        # never re-fetched), batch axis 'parallel' so both v7x TensorCores / megacore
        # split it, and x / output block DMAs software-pipeline against compute.
        row_bytes = 4 * (z_dim + out_width)            # f32 x-row + out-row
        vmem_budget = 24 * 1024 * 1024                 # headroom under v7x 32 MiB scoped default
        vmem_cap = max(256, (vmem_budget // (2 * row_bytes)) // SUBLANE * SUBLANE)
        tile = _round_up(pl.cdiv(B, 8), SUBLANE)       # aim for ~8 grid steps
        tile = max(256, min(tile, batch_tile, vmem_cap))
        steps = pl.cdiv(B, tile)
        padded_b = steps * tile
        x_in = x if padded_b == B else jnp.pad(x, ((0, padded_b - B), (0, 0)))

        def weight_spec(shape):
            return pl.BlockSpec(shape, lambda i: (0, 0))

        out_flat = pl.pallas_call(
            generator_kernel,
            out_shape=jax.ShapeDtypeStruct((padded_b, out_width), out_dtype),
            grid=(steps,),
            in_specs=[
                pl.BlockSpec((tile, z_dim), lambda i: (i, 0)),
                weight_spec((z_dim, d1)),
                weight_spec((1, d1)),
                weight_spec((d1, d2)),
                weight_spec((1, d2)),
                weight_spec((d2, out_width)),
                weight_spec((1, out_width)),
            ],
            out_specs=pl.BlockSpec((tile, out_width), lambda i: (i, 0)),
            compiler_params=pltpu.CompilerParams(dimension_semantics=("parallel",)),
            cost_estimate=cost,
        )(x_in, *inputs[1:])
    else:
        # Small-batch path: no grid (skips the 1-point-grid pipelining prologue/
        # epilogue and double buffering); everything is one resident VMEM block.
        vmem_spec = pl.BlockSpec(memory_space=pltpu.MemorySpace.VMEM)
        out_flat = pl.pallas_call(
            generator_kernel,
            out_shape=jax.ShapeDtypeStruct((B, out_width), out_dtype),
            in_specs=[vmem_spec] * len(inputs),
            out_specs=vmem_spec,
            cost_estimate=cost,
        )(*inputs)

    # Symmetrize + permute were folded into wh/bh offline, so this is pure layout
    # glue (slice + reshape), no extra pass over the dominant edge slab.
    edges_logits = out_flat[:B, :edges_dim].reshape(B, V, V, E)
    nodes_logits = out_flat[:B, edges_pad:edges_pad + nodes_dim].reshape(B, V, N)
    # TODO(synk): nn.Dropout is applied with eval-mode (identity) semantics; no stochastic mask.
    return edges_logits, nodes_logits


def init_params(key, z_dim, conv_dims, edges, vertexes, nodes):
    """Deterministic synthetic parameters with the same shapes as the torch module."""
    d1, d2 = conv_dims
    ks = jax.random.split(key, 8)
    scale = 0.1
    return {
        "w1": scale * jax.random.normal(ks[0], (z_dim, d1), jnp.float32),
        "b1": scale * jax.random.normal(ks[1], (1, d1), jnp.float32),
        "w2": scale * jax.random.normal(ks[2], (d1, d2), jnp.float32),
        "b2": scale * jax.random.normal(ks[3], (1, d2), jnp.float32),
        "we": scale * jax.random.normal(ks[4], (d2, edges * vertexes * vertexes), jnp.float32),
        "be": scale * jax.random.normal(ks[5], (1, edges * vertexes * vertexes), jnp.float32),
        "wn": scale * jax.random.normal(ks[6], (d2, vertexes * nodes), jnp.float32),
        "bn": scale * jax.random.normal(ks[7], (1, vertexes * nodes), jnp.float32),
    }


def reference_forward(x, params, *, edges, vertexes, nodes):
    """Pure-JAX reference mirroring the PyTorch forward (eval mode)."""
    B = x.shape[0]
    h = jnp.tanh(x @ params["w1"] + params["b1"])
    h = jnp.tanh(h @ params["w2"] + params["b2"])
    e = (h @ params["we"] + params["be"]).reshape(B, edges, vertexes, vertexes)
    e = (e + jnp.swapaxes(e, -1, -2)) / 2.0
    e = jnp.transpose(e, (0, 2, 3, 1))
    n = (h @ params["wn"] + params["bn"]).reshape(B, vertexes, nodes)
    return e, n


if __name__ == "__main__":
    # Shapes consistent with the module's constructor:
    #   z_dim=8, conv_dims=[32, 64], vertexes=8, edges=4, nodes=5
    Z = 8
    CONV_DIMS = [32, 64]
    V, E, N = 8, 4, 5

    key = jax.random.PRNGKey(0)
    k_x, k_p, k_x2 = jax.random.split(key, 3)
    params = init_params(k_p, Z, CONV_DIMS, E, V, N)

    # Hoisted one-time head fusion (symmetrize + permute folded into the columns).
    fused = prepare_generator_params(params, edges=E, vertexes=V, nodes=N)
    fused = jax.block_until_ready(fused)

    # 1) Small batch -> gridless single-VMEM-block path.
    B = 2
    x = jax.random.normal(k_x, (B, Z), jnp.float32)
    edges_logits, nodes_logits = classical_generator_forward(
        x, fused, edges=E, vertexes=V, nodes=N
    )
    jax.block_until_ready((edges_logits, nodes_logits))

    e_ref, n_ref = reference_forward(x, params, edges=E, vertexes=V, nodes=N)
    assert edges_logits.shape == (B, V, V, E)
    assert nodes_logits.shape == (B, V, N)
    assert jnp.allclose(edges_logits, e_ref, atol=1e-3, rtol=1e-3)
    assert jnp.allclose(nodes_logits, n_ref, atol=1e-3, rtol=1e-3)

    # 2) Large, NON-multiple batch -> cdiv grid + batch padding, 'parallel' batch axis
    #    (weights resident, x/out DMAs pipelined, shards across v7x dual TCs).
    B2 = 1000
    x2 = jax.random.normal(k_x2, (B2, Z), jnp.float32)
    edges_logits2, nodes_logits2 = classical_generator_forward(
        x2, fused, edges=E, vertexes=V, nodes=N
    )
    jax.block_until_ready((edges_logits2, nodes_logits2))

    e_ref2, n_ref2 = reference_forward(x2, params, edges=E, vertexes=V, nodes=N)
    assert edges_logits2.shape == (B2, V, V, E)
    assert nodes_logits2.shape == (B2, V, N)
    assert jnp.allclose(edges_logits2, e_ref2, atol=1e-3, rtol=1e-3)
    assert jnp.allclose(nodes_logits2, n_ref2, atol=1e-3, rtol=1e-3)

    print("KERNEL_OK")
</pallas_src>

<mosaic_0001>
module attributes {stable_mosaic.version = 11 : i64} {
  func.func @generator_kernel(%arg0: memref<2x8xf32, #tpu.memory_space<vmem>>, %arg1: memref<8x32xf32, #tpu.memory_space<vmem>>, %arg2: memref<1x32xf32, #tpu.memory_space<vmem>>, %arg3: memref<32x64xf32, #tpu.memory_space<vmem>>, %arg4: memref<1x64xf32, #tpu.memory_space<vmem>>, %arg5: memref<64x384xf32, #tpu.memory_space<vmem>>, %arg6: memref<1x384xf32, #tpu.memory_space<vmem>>, %arg7: memref<2x384xf32, #tpu.memory_space<vmem>>) attributes {dimension_semantics = [], scalar_prefetch = 0 : i64, scratch_operands = 0 : i64, tpu.core_type = #tpu.core_type<tc>} {
    %c0 = arith.constant 0 : index
    %c0_0 = arith.constant 0 : index
    %0 = vector.load %arg0[%c0, %c0_0] : memref<2x8xf32, #tpu.memory_space<vmem>>, vector<2x8xf32>
    %c0_1 = arith.constant 0 : index
    %c0_2 = arith.constant 0 : index
    %1 = vector.load %arg1[%c0_1, %c0_2] : memref<8x32xf32, #tpu.memory_space<vmem>>, vector<8x32xf32>
    %cst = arith.constant dense<0.000000e+00> : vector<2x32xf32>
    %2 = tpu.matmul %0, %1, %cst {dimension_numbers = #tpu.dot_dimension_numbers<[1], [0], [0], [1], [0, 0, 1, 1], [], []>} : vector<2x8xf32>, vector<8x32xf32>, vector<2x32xf32> -> vector<2x32xf32>
    %c0_3 = arith.constant 0 : index
    %c0_4 = arith.constant 0 : index
    %3 = vector.load %arg2[%c0_3, %c0_4] : memref<1x32xf32, #tpu.memory_space<vmem>>, vector<1x32xf32>
    %4 = vector.broadcast %3 : vector<1x32xf32> to vector<2x32xf32>
    %5 = arith.addf %2, %4 : vector<2x32xf32>
    %6 = math.tanh %5 : vector<2x32xf32>
    %c0_5 = arith.constant 0 : index
    %c0_6 = arith.constant 0 : index
    %7 = vector.load %arg3[%c0_5, %c0_6] : memref<32x64xf32, #tpu.memory_space<vmem>>, vector<32x64xf32>
    %cst_7 = arith.constant dense<0.000000e+00> : vector<2x64xf32>
    %8 = tpu.matmul %6, %7, %cst_7 {dimension_numbers = #tpu.dot_dimension_numbers<[1], [0], [0], [1], [0, 0, 1, 1], [], []>} : vector<2x32xf32>, vector<32x64xf32>, vector<2x64xf32> -> vector<2x64xf32>
    %c0_8 = arith.constant 0 : index
    %c0_9 = arith.constant 0 : index
    %9 = vector.load %arg4[%c0_8, %c0_9] : memref<1x64xf32, #tpu.memory_space<vmem>>, vector<1x64xf32>
    %10 = vector.broadcast %9 : vector<1x64xf32> to vector<2x64xf32>
    %11 = arith.addf %8, %10 : vector<2x64xf32>
    %12 = math.tanh %11 : vector<2x64xf32>
    %c0_10 = arith.constant 0 : index
    %c0_11 = arith.constant 0 : index
    %13 = vector.load %arg5[%c0_10, %c0_11] : memref<64x384xf32, #tpu.memory_space<vmem>>, vector<64x384xf32>
    %cst_12 = arith.constant dense<0.000000e+00> : vector<2x384xf32>
    %14 = tpu.matmul %12, %13, %cst_12 {dimension_numbers = #tpu.dot_dimension_numbers<[1], [0], [0], [1], [0, 0, 1, 1], [], []>} : vector<2x64xf32>, vector<64x384xf32>, vector<2x384xf32> -> vector<2x384xf32>
    %c0_13 = arith.constant 0 : index
    %c0_14 = arith.constant 0 : index
    %15 = vector.load %arg6[%c0_13, %c0_14] : memref<1x384xf32, #tpu.memory_space<vmem>>, vector<1x384xf32>
    %16 = vector.broadcast %15 : vector<1x384xf32> to vector<2x384xf32>
    %17 = arith.addf %14, %16 : vector<2x384xf32>
    %c0_15 = arith.constant 0 : index
    %c0_16 = arith.constant 0 : index
    %18 = vector.load %arg7[%c0_15, %c0_16] : memref<2x384xf32, #tpu.memory_space<vmem>>, vector<2x384xf32>
    tpu.vector_store %arg7[%c0_15, %c0_16], %17 {strides = array<i32>} : memref<2x384xf32, #tpu.memory_space<vmem>>, vector<2x384xf32>,
    return
  }
}

</mosaic_0001>

<llo_original>
// kernel: tpu_custom_call.1
$region0: #{tpu_custom_call.1}
  #allocation0 [shape = 'u32[]', space=smem, size = 0x4, offset = 0x4, fixed_abs, tag = 'smem constant byte address 0x4 - core index']
  #allocation1 [shape = 'u32[144,128]{1,0:T(1,128)}', space=vmem, size = 0x12000, scoped, tag = 'internal scratch']
  %s0 = inlined_call_operand.hbm [shape: f32[2,8], index: 0, kind: input, shape index: {}]
  %s1 = inlined_call_operand.hbm [shape: f32[8,32], index: 1, kind: input, shape index: {}]
  %s2 = inlined_call_operand.vmem [shape: f32[1,32], index: 2, kind: input, shape index: {}]
  %s3 = inlined_call_operand.hbm [shape: f32[32,64], index: 3, kind: input, shape index: {}]
  %s4 = inlined_call_operand.vmem [shape: f32[1,64], index: 4, kind: input, shape index: {}]
  %s5 = inlined_call_operand.hbm [shape: f32[64,384], index: 5, kind: input, shape index: {}]
  %s6 = inlined_call_operand.vmem [shape: f32[1,384], index: 6, kind: input, shape index: {}]
  %s7 = inlined_call_operand.hbm [shape: f32[2,384], index: 7, kind: output, shape index: {}]
  %s8 = sld [smem:[#allocation0]]
  $region54: #{tpu_custom_call.1} parent=0
    _
  %s10 = ssub.s32 1, %s8
  %s11 = scalar_select 0, %s10, %s8
  $region1: #{tpu_custom_call.1} parent=0
    #allocation2 [shape = 'u8[1024]{0}', space=vmem, size = 0x400, scoped, tag = 'input window, operand 0, single buffered']
    #allocation3 [shape = 's32[1]{0}', space=sflag, size = 0x4, scoped, tag = 'scoped memory for tpu_custom_call.1']
    #allocation4 [shape = 's32[1]{0}', space=sflag, size = 0x4, scoped, tag = 'scoped memory for tpu_custom_call.1']
    #allocation5 [shape = 'u8[4096]{0}', space=vmem, size = 0x1000, scoped, tag = 'input window, operand 1, single buffered']
    #allocation6 [shape = 's32[1]{0}', space=sflag, size = 0x4, scoped, tag = 'scoped memory for tpu_custom_call.1']
    #allocation7 [shape = 'u8[16384]{0}', space=vmem, size = 0x4000, scoped, tag = 'input window, operand 3, single buffered']
    #allocation8 [shape = 'u8[98304]{0}', space=vmem, size = 0x18000, scoped, tag = 'input window, operand 5, single buffered']
    #allocation9 [shape = 's32[1]{0}', space=sflag, size = 0x4, scoped, tag = 'scoped memory for tpu_custom_call.1']
    #allocation10 [shape = 'u8[3072]{0}', space=vmem, size = 0xc00, scoped, tag = 'output window, operand 0, single buffered']
    %12 = vsyncpa [#allocation3], 0
    %13 = vsyncpa [#allocation6], 0
    %14 = vsyncpa [#allocation9], 0
    %15 = vsyncpa [#allocation4], 0
    // Predicated region
    $region2: #{tpu_custom_call.1} parent=1 // pred_check
      _
    $region3: #{tpu_custom_call.1} parent=1 // pred_check_branch
      %17 = sbr.rel (0) target = $region5
    $region4: #{tpu_custom_call.1} parent=1 // pred_region
      %s19 = ssub.s32 32, 32
      %20 = vsyncadd [#allocation3], %s19
      %s22 = sshll.u32 [#allocation2], 4
      %s23 = int_to_ptr.vmem [resolvable:$true] %s22
      %25 = dma.hbm_to_vmem [thread:$0]  %s0, 32, %s23, [#allocation3]
    $region5: #{tpu_custom_call.1} parent=1 // pred_fallthru
      _
    // Predicated region
    $region6: #{tpu_custom_call.1} parent=1 // pred_check
      _
    $region7: #{tpu_custom_call.1} parent=1 // pred_check_branch
      %27 = sbr.rel (0) target = $region9
    $region8: #{tpu_custom_call.1} parent=1 // pred_region
      %s29 = ssub.s32 128, 128
      %30 = vsyncadd [#allocation6], %s29
      %s32 = sshll.u32 [#allocation5], 4
      %s33 = int_to_ptr.vmem [resolvable:$true] %s32
      %35 = dma.hbm_to_vmem [thread:$0]  %s1, 128, %s33, [#allocation6]
    $region9: #{tpu_custom_call.1} parent=1 // pred_fallthru
      _
    // Predicated region
    $region10: #{tpu_custom_call.1} parent=1 // pred_check
      _
    $region11: #{tpu_custom_call.1} parent=1 // pred_check_branch
      %37 = sbr.rel (0) target = $region13
    $region12: #{tpu_custom_call.1} parent=1 // pred_region
      _
    $region13: #{tpu_custom_call.1} parent=1 // pred_fallthru
      _
    // Predicated region
    $region14: #{tpu_custom_call.1} parent=1 // pred_check
      _
    $region15: #{tpu_custom_call.1} parent=1 // pred_check_branch
      %39 = sbr.rel (0) target = $region17
    $region16: #{tpu_custom_call.1} parent=1 // pred_region
      %s41 = ssub.s32 512, 512
      %42 = vsyncadd [#allocation6], %s41
      %s43 = sshll.u32 [#allocation7], 4
      %s44 = int_to_ptr.vmem [resolvable:$true] %s43
      %49 = dma.hbm_to_vmem [thread:$0]  %s3, 512, %s44, [#allocation6], 128, 128, 8
    $region17: #{tpu_custom_call.1} parent=1 // pred_fallthru
      _
    // Predicated region
    $region18: #{tpu_custom_call.1} parent=1 // pred_check
      _
    $region19: #{tpu_custom_call.1} parent=1 // pred_check_branch
      %51 = sbr.rel (0) target = $region21
    $region20: #{tpu_custom_call.1} parent=1 // pred_region
      _
    $region21: #{tpu_custom_call.1} parent=1 // pred_fallthru
      _
    // Predicated region
    $region22: #{tpu_custom_call.1} parent=1 // pred_check
      _
    $region23: #{tpu_custom_call.1} parent=1 // pred_check_branch
      %53 = sbr.rel (0) target = $region25
    $region24: #{tpu_custom_call.1} parent=1 // pred_region
      %s55 = ssub.s32 3072, 3072
      %56 = vsyncadd [#allocation9], %s55
      %s57 = sshll.u32 [#allocation8], 4
      %s58 = int_to_ptr.vmem [resolvable:$true] %s57
      %63 = dma.hbm_to_vmem [thread:$0]  %s5, 3072, %s58, [#allocation9], 384, 384, 24
    $region25: #{tpu_custom_call.1} parent=1 // pred_fallthru
      _
    // Predicated region
    $region26: #{tpu_custom_call.1} parent=1 // pred_check
      _
    $region27: #{tpu_custom_call.1} parent=1 // pred_check_branch
      %65 = sbr.rel (0) target = $region29
    $region28: #{tpu_custom_call.1} parent=1 // pred_region
      _
    $region29: #{tpu_custom_call.1} parent=1 // pred_fallthru
      _
    // Predicated region
    $region30: #{tpu_custom_call.1} parent=1 // pred_check
      _
    $region31: #{tpu_custom_call.1} parent=1 // pred_check_branch
      %67 = sbr.rel (0) target = $region33
    $region32: #{tpu_custom_call.1} parent=1 // pred_region
      %68 = dma.done [#allocation3], 32
    $region33: #{tpu_custom_call.1} parent=1 // pred_fallthru
      _
    // Predicated region
    $region34: #{tpu_custom_call.1} parent=1 // pred_check
      _
    $region35: #{tpu_custom_call.1} parent=1 // pred_check_branch
      %70 = sbr.rel (0) target = $region37
    $region36: #{tpu_custom_call.1} parent=1 // pred_region
      %71 = dma.done [#allocation6], 128
    $region37: #{tpu_custom_call.1} parent=1 // pred_fallthru
      _
    // Predicated region
    $region38: #{tpu_custom_call.1} parent=1 // pred_check
      _
    $region39: #{tpu_custom_call.1} parent=1 // pred_check_branch
      %73 = sbr.rel (0) target = $region41
    $region40: #{tpu_custom_call.1} parent=1 // pred_region
      %74 = dma.done [#allocation6], 512
    $region41: #{tpu_custom_call.1} parent=1 // pred_fallthru
      _
    // Predicated region
    $region42: #{tpu_custom_call.1} parent=1 // pred_check
      _
    $region43: #{tpu_custom_call.1} parent=1 // pred_check_branch
      %76 = sbr.rel (0) target = $region45
    $region44: #{tpu_custom_call.1} parent=1 // pred_region
      %77 = dma.done [#allocation9], 3072
    $region45: #{tpu_custom_call.1} parent=1 // pred_fallthru
      _
    %v78 = vld [vmem:[#allocation2] sm:$0x3]
    %v79 = vld [vmem:[#allocation5] sm:$0xff]
    %v80 = vld [vmem:[%s2] sm:$0x1]
    %v82 = vlaneseq
    %v83 = vshrl.u32 %v82, 7
    %v84 = vsub.s32 0, %v83
    %v85 = vrot.slane %v80, %v84
    %vm87 = vcmask 64512
    %v89 = vsel %vm87, %v78, 0
    %91 = vmatprep.subr.mxu0 0.0
    %92 = vmatpush1.msra.mxu0 %v79
    %93 = vmatprep.subr.mxu0 0.0
    %94 = vmatpush1.msra.mxu0 0.0
    %95 = vmatprep.subr.mxu0 0.0
    %96 = vmatpush1.msra.mxu0 0.0
    %97 = vmatprep.subr.mxu0 0.0
    %98 = vmatpush1.msra.mxu0 0.0
    %99 = vmatprep.subr.mxu0 0.0
    %100 = vmatpush1.msra.mxu0 0.0
    %101 = vmatprep.subr.mxu0 0.0
    %102 = vmatpush1.msra.mxu0 0.0
    %103 = vmatprep.subr.mxu0 0.0
    %104 = vmatpush1.msra.mxu0 0.0
    %105 = vmatprep.subr.mxu0 0.0
    %106 = vmatpush1.msra.mxu0 0.0
    %107 = vmatprep.subr.mxu0 0.0
    %108 = vmatpush1.msra.mxu0 0.0
    %109 = vmatprep.subr.mxu0 0.0
    %110 = vmatpush1.msra.mxu0 0.0
    %111 = vmatprep.subr.mxu0 0.0
    %112 = vmatpush1.msra.mxu0 0.0
    %113 = vmatprep.subr.mxu0 0.0
    %114 = vmatpush1.msra.mxu0 0.0
    %115 = vmatprep.subr.mxu0 0.0
    %116 = vmatpush1.msra.mxu0 0.0
    %117 = vmatprep.subr.mxu0 0.0
    %118 = vmatpush1.msra.mxu0 0.0
    %119 = vmatprep.subr.mxu0 0.0
    %120 = vmatpush1.msra.mxu0 0.0
    %121 = vmatprep.subr.mxu0 0.0
    %122 = vmatpush1.msra.mxu0 0.0
    %123 = vmatprep.subr.mxu0 0.0
    %124 = vmatpush1.msra.mxu0 0.0
    %125 = vmatprep.subr.mxu0 0.0
    %126 = vmatpush1.msra.mxu0 0.0
    %127 = vmatprep.subr.mxu0 0.0
    %128 = vmatpush1.msra.mxu0 0.0
    %129 = vmatprep.subr.mxu0 0.0
    %130 = vmatpush1.msra.mxu0 0.0
    %131 = vmatprep.subr.mxu0 0.0
    %132 = vmatpush1.msra.mxu0 0.0
    %133 = vmatprep.subr.mxu0 0.0
    %134 = vmatpush1.msra.mxu0 0.0
    %135 = vmatprep.subr.mxu0 0.0
    %136 = vmatpush1.msra.mxu0 0.0
    %137 = vmatprep.subr.mxu0 0.0
    %138 = vmatpush1.msra.mxu0 0.0
    %139 = vmatprep.subr.mxu0 0.0
    %140 = vmatpush1.msra.mxu0 0.0
    %141 = vmatprep.subr.mxu0 0.0
    %142 = vmatpush1.msra.mxu0 0.0
    %143 = vmatprep.subr.mxu0 0.0
    %144 = vmatpush1.msra.mxu0 0.0
    %145 = vmatprep.subr.mxu0 0.0
    %146 = vmatpush1.msra.mxu0 0.0
    %147 = vmatprep.subr.mxu0 0.0
    %148 = vmatpush1.msra.mxu0 0.0
    %149 = vmatprep.subr.mxu0 0.0
    %150 = vmatpush1.msra.mxu0 0.0
    %151 = vmatprep.subr.mxu0 0.0
    %152 = vmatpush1.msra.mxu0 0.0
    %153 = vmatprep.subr.mxu0 0.0
    %154 = vmatpush1.msra.mxu0 0.0
    %155 = vmatprep.mubr.f32.mxu0 0.0
    %156 = vmatmul.mubr.f32.gmra.mrb[0].mxu0 %v89
    %v157 = vpop.f32.mrb[0].mxu0
    %v158 = vadd.f32 %v85, %v157
    %v159 = vpop.f32.mrb[0].mxu0
    %160 = vdwg.mxu0
    %v161 = vtanh.pop %v158
    %v162 = vld [vmem:[#allocation7] sm:$0xff]
    %v163 = vld [vmem:[#allocation7 + $0x8] sm:$0xff]
    %v164 = vld [vmem:[#allocation7 + $0x10] sm:$0xff]
    %v165 = vld [vmem:[#allocation7 + $0x18] sm:$0xff]
    %v166 = vld [vmem:[%s4] sm:$0x1]
    %v168 = vlaneseq
    %v169 = vshrl.u32 %v168, 7
    %v170 = vsub.s32 0, %v169
    %v171 = vrot.slane %v166, %v170
    %vm173 = vcmask 261120
    %v175 = vsel %vm173, %v161, 0
    %177 = vmatprep.subr.mxu0 0.0
    %178 = vmatpush1.msra.mxu0 %v162
    %179 = vmatprep.subr.mxu0 0.0
    %180 = vmatpush1.msra.mxu0 %v163
    %181 = vmatprep.subr.mxu0 0.0
    %182 = vmatpush1.msra.mxu0 %v164
    %183 = vmatprep.subr.mxu0 0.0
    %184 = vmatpush1.msra.mxu0 %v165
    %185 = vmatprep.subr.mxu0 0.0
    %186 = vmatpush1.msra.mxu0 0.0
    %187 = vmatprep.subr.mxu0 0.0
    %188 = vmatpush1.msra.mxu0 0.0
    %189 = vmatprep.subr.mxu0 0.0
    %190 = vmatpush1.msra.mxu0 0.0
    %191 = vmatprep.subr.mxu0 0.0
    %192 = vmatpush1.msra.mxu0 0.0
    %193 = vmatprep.subr.mxu0 0.0
    %194 = vmatpush1.msra.mxu0 0.0
    %195 = vmatprep.subr.mxu0 0.0
    %196 = vmatpush1.msra.mxu0 0.0
    %197 = vmatprep.subr.mxu0 0.0
    %198 = vmatpush1.msra.mxu0 0.0
    %199 = vmatprep.subr.mxu0 0.0
    %200 = vmatpush1.msra.mxu0 0.0
    %201 = vmatprep.subr.mxu0 0.0
    %202 = vmatpush1.msra.mxu0 0.0
    %203 = vmatprep.subr.mxu0 0.0
    %204 = vmatpush1.msra.mxu0 0.0
    %205 = vmatprep.subr.mxu0 0.0
    %206 = vmatpush1.msra.mxu0 0.0
    %207 = vmatprep.subr.mxu0 0.0
    %208 = vmatpush1.msra.mxu0 0.0
    %209 = vmatprep.subr.mxu0 0.0
    %210 = vmatpush1.msra.mxu0 0.0
    %211 = vmatprep.subr.mxu0 0.0
    %212 = vmatpush1.msra.mxu0 0.0
    %213 = vmatprep.subr.mxu0 0.0
    %214 = vmatpush1.msra.mxu0 0.0
    %215 = vmatprep.subr.mxu0 0.0
    %216 = vmatpush1.msra.mxu0 0.0
    %217 = vmatprep.subr.mxu0 0.0
    %218 = vmatpush1.msra.mxu0 0.0
    %219 = vmatprep.subr.mxu0 0.0
    %220 = vmatpush1.msra.mxu0 0.0
    %221 = vmatprep.subr.mxu0 0.0
    %222 = vmatpush1.msra.mxu0 0.0
    %223 = vmatprep.subr.mxu0 0.0
    %224 = vmatpush1.msra.mxu0 0.0
    %225 = vmatprep.subr.mxu0 0.0
    %226 = vmatpush1.msra.mxu0 0.0
    %227 = vmatprep.subr.mxu0 0.0
    %228 = vmatpush1.msra.mxu0 0.0
    %229 = vmatprep.subr.mxu0 0.0
    %230 = vmatpush1.msra.mxu0 0.0
    %231 = vmatprep.subr.mxu0 0.0
    %232 = vmatpush1.msra.mxu0 0.0
    %233 = vmatprep.subr.mxu0 0.0
    %234 = vmatpush1.msra.mxu0 0.0
    %235 = vmatprep.subr.mxu0 0.0
    %236 = vmatpush1.msra.mxu0 0.0
    %237 = vmatprep.subr.mxu0 0.0
    %238 = vmatpush1.msra.mxu0 0.0
    %239 = vmatprep.subr.mxu0 0.0
    %240 = vmatpush1.msra.mxu0 0.0
    %241 = vmatprep.mubr.f32.mxu0 0.0
    %242 = vmatmul.mubr.f32.gmra.mrb[0].mxu0 %v175
    %v243 = vpop.f32.mrb[0].mxu0
    %v244 = vadd.f32 %v171, %v243
    %v245 = vpop.f32.mrb[0].mxu0
    %246 = vdwg.mxu0
    %v247 = vtanh.pop %v244
    %v248 = vld [vmem:[#allocation8] sm:$0xff]
    %v249 = vld [vmem:[#allocation8 + $0x8] sm:$0xff]
    %v250 = vld [vmem:[#allocation8 + $0x10] sm:$0xff]
    %v251 = vld [vmem:[#allocation8 + $0x18] sm:$0xff]
    %v252 = vld [vmem:[#allocation8 + $0x20] sm:$0xff]
    %v253 = vld [vmem:[#allocation8 + $0x28] sm:$0xff]
    %v254 = vld [vmem:[#allocation8 + $0x30] sm:$0xff]
    %v255 = vld [vmem:[#allocation8 + $0x38] sm:$0xff]
    %v256 = vld [vmem:[#allocation8 + $0x40] sm:$0xff]
    %v257 = vld [vmem:[#allocation8 + $0x48] sm:$0xff]
    %v258 = vld [vmem:[#allocation8 + $0x50] sm:$0xff]
    %v259 = vld [vmem:[#allocation8 + $0x58] sm:$0xff]
    %v260 = vld [vmem:[#allocation8 + $0x60] sm:$0xff]
    %v261 = vld [vmem:[#allocation8 + $0x68] sm:$0xff]
    %v262 = vld [vmem:[#allocation8 + $0x70] sm:$0xff]
    %v263 = vld [vmem:[#allocation8 + $0x78] sm:$0xff]
    %v264 = vld [vmem:[#allocation8 + $0x80] sm:$0xff]
    %v265 = vld [vmem:[#allocation8 + $0x88] sm:$0xff]
    %v266 = vld [vmem:[#allocation8 + $0x90] sm:$0xff]
    %v267 = vld [vmem:[#allocation8 + $0x98] sm:$0xff]
    %v268 = vld [vmem:[#allocation8 + $0xa0] sm:$0xff]
    %v269 = vld [vmem:[#allocation8 + $0xa8] sm:$0xff]
    %v270 = vld [vmem:[#allocation8 + $0xb0] sm:$0xff]
    %v271 = vld [vmem:[#allocation8 + $0xb8] sm:$0xff]
    %v272 = vld [vmem:[%s6] sm:$0x7]
    %v274 = vlaneseq
    %v275 = vshrl.u32 %v274, 7
    %v276 = vsub.s32 0, %v275
    %v277 = vrot.slane %v272, %v276
    %v278 = vlaneseq
    %v279 = vshrl.u32 %v278, 7
    %v280 = vsub.s32 1, %v279
    %v281 = vrot.slane %v272, %v280
    %v282 = vlaneseq
    %v283 = vshrl.u32 %v282, 7
    %v284 = vsub.s32 2, %v283
    %v285 = vrot.slane %v272, %v284
    %vm289 = vcmask 523264
    %v291 = vsel %vm289, %v247, 0
    %293 = vmatprep.subr.mxu0 %v249
    %294 = vmatpush1.msra.mxu0 %v248
    %295 = vmatprep.subr.mxu0 %v252
    %296 = vmatpush1.msra.mxu0 %v251
    %297 = vmatprep.subr.mxu0 %v255
    %298 = vmatpush1.msra.mxu0 %v254
    %299 = vmatprep.subr.mxu0 %v258
    %300 = vmatpush1.msra.mxu0 %v257
    %301 = vmatprep.subr.mxu0 %v261
    %302 = vmatpush1.msra.mxu0 %v260
    %303 = vmatprep.subr.mxu0 %v264
    %304 = vmatpush1.msra.mxu0 %v263
    %305 = vmatprep.subr.mxu0 %v267
    %306 = vmatpush1.msra.mxu0 %v266
    %307 = vmatprep.subr.mxu0 %v270
    %308 = vmatpush1.msra.mxu0 %v269
    %309 = vmatprep.subr.mxu0 0.0
    %310 = vmatpush1.msra.mxu0 0.0
    %311 = vmatprep.subr.mxu0 0.0
    %312 = vmatpush1.msra.mxu0 0.0
    %313 = vmatprep.subr.mxu0 0.0
    %314 = vmatpush1.msra.mxu0 0.0
    %315 = vmatprep.subr.mxu0 0.0
    %316 = vmatpush1.msra.mxu0 0.0
    %317 = vmatprep.subr.mxu0 0.0
    %318 = vmatpush1.msra.mxu0 0.0
    %319 = vmatprep.subr.mxu0 0.0
    %320 = vmatpush1.msra.mxu0 0.0
    %321 = vmatprep.subr.mxu0 0.0
    %322 = vmatpush1.msra.mxu0 0.0
    %323 = vmatprep.subr.mxu0 0.0
    %324 = vmatpush1.msra.mxu0 0.0
    %325 = vmatprep.subr.mxu0 0.0
    %326 = vmatpush1.msra.mxu0 0.0
    %327 = vmatprep.subr.mxu0 0.0
    %328 = vmatpush1.msra.mxu0 0.0
    %329 = vmatprep.subr.mxu0 0.0
    %330 = vmatpush1.msra.mxu0 0.0
    %331 = vmatprep.subr.mxu0 0.0
    %332 = vmatpush1.msra.mxu0 0.0
    %333 = vmatprep.subr.mxu0 0.0
    %334 = vmatpush1.msra.mxu0 0.0
    %335 = vmatprep.subr.mxu0 0.0
    %336 = vmatpush1.msra.mxu0 0.0
    %337 = vmatprep.subr.mxu0 0.0
    %338 = vmatpush1.msra.mxu0 0.0
    %339 = vmatprep.subr.mxu0 0.0
    %340 = vmatpush1.msra.mxu0 0.0
    %341 = vmatprep.subr.mxu0 0.0
    %342 = vmatpush1.msra.mxu0 0.0
    %343 = vmatprep.subr.mxu0 0.0
    %344 = vmatpush1.msra.mxu0 0.0
    %345 = vmatprep.subr.mxu0 0.0
    %346 = vmatpush1.msra.mxu0 0.0
    %347 = vmatprep.subr.mxu0 0.0
    %348 = vmatpush1.msra.mxu0 0.0
    %349 = vmatprep.subr.mxu0 0.0
    %350 = vmatpush1.msra.mxu0 0.0
    %351 = vmatprep.subr.mxu0 0.0
    %352 = vmatpush1.msra.mxu0 0.0
    %353 = vmatprep.subr.mxu0 0.0
    %354 = vmatpush1.msra.mxu0 0.0
    %355 = vmatprep.subr.mxu0 0.0
    %356 = vmatpush1.msra.mxu0 0.0
    %357 = vmatprep.mubr.f32.mxu0 0.0
    %358 = vmatmul.mubr.f32.gmra.mrb[0].mxu0 %v291
    %v359 = vpop.f32.mrb[0].mxu0
    %v360 = vadd.f32 %v277, %v359
    %v361 = vpop.f32.mrb[0].mxu0
    %v362 = vadd.f32 %v281, %v361
    %363 = vdwg.mxu0
    %364 = vmatprep.subr.mxu0 0.0
    %365 = vmatpush1.msra.mxu0 %v250
    %366 = vmatprep.subr.mxu0 0.0
    %367 = vmatpush1.msra.mxu0 %v253
    %368 = vmatprep.subr.mxu0 0.0
    %369 = vmatpush1.msra.mxu0 %v256
    %370 = vmatprep.subr.mxu0 0.0
    %371 = vmatpush1.msra.mxu0 %v259
    %372 = vmatprep.subr.mxu0 0.0
    %373 = vmatpush1.msra.mxu0 %v262
    %374 = vmatprep.subr.mxu0 0.0
    %375 = vmatpush1.msra.mxu0 %v265
    %376 = vmatprep.subr.mxu0 0.0
    %377 = vmatpush1.msra.mxu0 %v268
    %378 = vmatprep.subr.mxu0 0.0
    %379 = vmatpush1.msra.mxu0 %v271
    %380 = vmatprep.subr.mxu0 0.0
    %381 = vmatpush1.msra.mxu0 0.0
    %382 = vmatprep.subr.mxu0 0.0
    %383 = vmatpush1.msra.mxu0 0.0
    %384 = vmatprep.subr.mxu0 0.0
    %385 = vmatpush1.msra.mxu0 0.0
    %386 = vmatprep.subr.mxu0 0.0
    %387 = vmatpush1.msra.mxu0 0.0
    %388 = vmatprep.subr.mxu0 0.0
    %389 = vmatpush1.msra.mxu0 0.0
    %390 = vmatprep.subr.mxu0 0.0
    %391 = vmatpush1.msra.mxu0 0.0
    %392 = vmatprep.subr.mxu0 0.0
    %393 = vmatpush1.msra.mxu0 0.0
    %394 = vmatprep.subr.mxu0 0.0
    %395 = vmatpush1.msra.mxu0 0.0
    %396 = vmatprep.subr.mxu0 0.0
    %397 = vmatpush1.msra.mxu0 0.0
    %398 = vmatprep.subr.mxu0 0.0
    %399 = vmatpush1.msra.mxu0 0.0
    %400 = vmatprep.subr.mxu0 0.0
    %401 = vmatpush1.msra.mxu0 0.0
    %402 = vmatprep.subr.mxu0 0.0
    %403 = vmatpush1.msra.mxu0 0.0
    %404 = vmatprep.subr.mxu0 0.0
    %405 = vmatpush1.msra.mxu0 0.0
    %406 = vmatprep.subr.mxu0 0.0
    %407 = vmatpush1.msra.mxu0 0.0
    %408 = vmatprep.subr.mxu0 0.0
    %409 = vmatpush1.msra.mxu0 0.0
    %410 = vmatprep.subr.mxu0 0.0
    %411 = vmatpush1.msra.mxu0 0.0
    %412 = vmatprep.subr.mxu0 0.0
    %413 = vmatpush1.msra.mxu0 0.0
    %414 = vmatprep.subr.mxu0 0.0
    %415 = vmatpush1.msra.mxu0 0.0
    %416 = vmatprep.subr.mxu0 0.0
    %417 = vmatpush1.msra.mxu0 0.0
    %418 = vmatprep.subr.mxu0 0.0
    %419 = vmatpush1.msra.mxu0 0.0
    %420 = vmatprep.subr.mxu0 0.0
    %421 = vmatpush1.msra.mxu0 0.0
    %422 = vmatprep.subr.mxu0 0.0
    %423 = vmatpush1.msra.mxu0 0.0
    %424 = vmatprep.subr.mxu0 0.0
    %425 = vmatpush1.msra.mxu0 0.0
    %426 = vmatprep.subr.mxu0 0.0
    %427 = vmatpush1.msra.mxu0 0.0
    %428 = vmatprep.mubr.f32.mxu0 0.0
    %429 = vmatmul.mubr.f32.gmra.mrb[0].mxu0 %v291
    %v430 = vpop.f32.mrb[0].mxu0
    %v431 = vadd.f32 %v285, %v430
    %v432 = vpop.f32.mrb[0].mxu0
    %433 = vdwg.mxu0
    %v437 = vcombine.low %v360, %v362
    %v439 = vunpack.c.l.s4 1983009808
    %v440 = vunpack.c.0.s8 %v439
    %v441 = vlaneseq
    %v442 = vshrl.u32 %v441, 7
    %v443 = vsub.s32 %v440, %v442
    %v444 = vrot.slane %v437, %v443
    %v446 = vunpack.c.l.s4 1983009808
    %v447 = vunpack.c.0.s8 %v446
    %v448 = vlaneseq
    %v449 = vshrl.u32 %v448, 7
    %v450 = vsub.s32 %v447, %v449
    %v451 = vrot.slane %v431, %v450
    %v452 = vcombine.low %v444, %v451
    %454 = vst [vmem:[#allocation10] sm:$0x3f] %v452
    // Predicated region
    $region46: #{tpu_custom_call.1} parent=1 // pred_check
      _
    $region47: #{tpu_custom_call.1} parent=1 // pred_check_branch
      %456 = sbr.rel (0) target = $region49
    $region48: #{tpu_custom_call.1} parent=1 // pred_region
      %s458 = ssub.s32 96, 96
      %459 = vsyncadd [#allocation4], %s458
      %s461 = sshll.u32 [#allocation10], 4
      %s462 = int_to_ptr.vmem [resolvable:$true] %s461
      %464 = dma.vmem_to_hbm [thread:$0]  %s462, 96, %s7, [#allocation4]
    $region49: #{tpu_custom_call.1} parent=1 // pred_fallthru
      _
    // Predicated region
    $region50: #{tpu_custom_call.1} parent=1 // pred_check
      _
    $region51: #{tpu_custom_call.1} parent=1 // pred_check_branch
      %466 = sbr.rel (0) target = $region53
    $region52: #{tpu_custom_call.1} parent=1 // pred_region
      %467 = dma.done [#allocation4], 96
    $region53: #{tpu_custom_call.1} parent=1 // pred_fallthru
      _
    %468 = vsyncpa [#allocation3], 1
    %469 = vsyncpa [#allocation6], 1
    %470 = vsyncpa [#allocation9], 1
    %471 = vsyncpa [#allocation4], 1

</llo_original>
